<compile_context>
chip_gen: v6e
topology: v6e:2x2x1
jax: 0.10.0
libtpu: 0.0.40
codegen_flags: <defaults>
</compile_context>

<pallas_src>
import functools

import jax
import jax.numpy as jnp
from jax.experimental import pallas as pl
from jax.experimental.pallas import tpu as pltpu

EPS = 1e-6
LANES = 128
TM_MAX = 8192      # rows per grid step (f32: 4 MiB per input block)
STRIP = 512        # rows per inner strip (keeps intermediates tiny)


def _sqrt_cube_loss_kernel(p_ref, t_ref, o_ref, *, n_valid, strip, needs_mask):
    """Accumulate sum(sqrt(differentiable_abs(p - t)**3 + eps)) into (1,8,128)."""
    @pl.when(pl.program_id(1) == 0)
    def _():
        o_ref[...] = jnp.zeros_like(o_ref)

    tm = p_ref.shape[0]
    n_strips = tm // strip
    # Global row offset of this block (outer axis = megacore split).
    row0 = (pl.program_id(0) * pl.num_programs(1) + pl.program_id(1)) * tm

    if needs_mask:
        # Element index within one strip; hoisted out of the strip loop so the
        # per-strip mask is just one compare + one select (VPU slot has slack).
        ridx = jax.lax.broadcasted_iota(jnp.int32, (strip, LANES), 0)
        lidx = jax.lax.broadcasted_iota(jnp.int32, (strip, LANES), 1)
        gidx = ridx * LANES + lidx

    @pl.loop(0, n_strips, unroll=n_strips <= 8)
    def _(s):
        r = pl.multiple_of(s * strip, strip)
        pv = p_ref[pl.ds(r, strip), :].astype(jnp.float32)
        tv = t_ref[pl.ds(r, strip), :].astype(jnp.float32)
        diff = pv - tv
        d2 = diff * diff + EPS           # differentiable_abs(diff) ** 2
        a = jnp.sqrt(d2)                 # differentiable_abs(diff)
        val = jnp.sqrt(a * d2 + EPS)     # a * d2 == a ** 3  (since d2 == a*a)
        if needs_mask:
            limit = n_valid - (row0 + r) * LANES
            val = jnp.where(gidx < limit, val, 0.0)
        # Fold (strip,128) -> (8,128) with plain vreg adds; the single
        # expensive cross-lane reduce stays outside on <= 2K elements.
        psum = jnp.sum(val.reshape(strip // 8, 8, LANES), axis=0)
        o_ref[...] += psum[None, :, :]


def _round_up(x, m):
    return ((x + m - 1) // m) * m


def square_root_cube_loss(predictions, targets):
    assert predictions.shape == targets.shape
    n = int(predictions.size)
    p = predictions.reshape(-1)
    t = targets.reshape(-1)

    rows = -(-n // LANES)                        # ceil(n / 128)
    lane_pad = rows * LANES - n
    if lane_pad:
        # TODO(synk): only the <128-element lane remainder needs this pad (to
        # form the 2-D lane-dense view); block-level tails are masked in-kernel.
        p = jnp.pad(p, (0, lane_pad))
        t = jnp.pad(t, (0, lane_pad))
    p2 = p.reshape(rows, LANES)
    t2 = t.reshape(rows, LANES)

    # Sublane packing: 8 rows for 32-bit, 16 for 16-bit, 32 for 8-bit dtypes.
    itemsize = jnp.dtype(predictions.dtype).itemsize
    sub = {4: 8, 2: 16, 1: 32}.get(itemsize, 8)

    if rows <= 1024:
        tm = _round_up(rows, sub)                # single strip, single block
        strip = tm
    else:
        tm = min(TM_MAX, _round_up(rows, STRIP))
        strip = STRIP

    n_blk = -(-rows // tm)
    # Megacore split only when it costs nothing (even block count); odd counts
    # run on one core instead of forcing a duplicate / padded block.
    outer = 2 if (n_blk >= 2 and n_blk % 2 == 0) else 1
    inner = n_blk // outer

    needs_mask = (n_blk * tm * LANES) != n       # any tail rows / lanes to drop

    kernel = functools.partial(_sqrt_cube_loss_kernel,
                               n_valid=n, strip=strip, needs_mask=needs_mask)

    in_blk = pl.BlockSpec((tm, LANES), lambda o, i: (o * inner + i, 0))
    out_blk = pl.BlockSpec((1, 8, LANES), lambda o, i: (o, 0, 0))

    partials = pl.pallas_call(
        kernel,
        out_shape=jax.ShapeDtypeStruct((outer, 8, LANES), jnp.float32),
        grid_spec=pltpu.PrefetchScalarGridSpec(
            num_scalar_prefetch=0,
            grid=(outer, inner),
            in_specs=[in_blk, in_blk],
            out_specs=out_blk,
        ),
        compiler_params=pltpu.CompilerParams(
            dimension_semantics=("parallel", "arbitrary"),
            vmem_limit_bytes=32 * 1024 * 1024),
    )(p2, t2)

    # Tiny (<= 2048-element) cross-lane reduce + mean: one fused XLA op.
    return (jnp.sum(partials) / jnp.float32(n)).astype(jnp.float32)


def _reference(predictions, targets):
    diff = predictions.astype(jnp.float32) - targets.astype(jnp.float32)
    a = jnp.sqrt(diff * diff + EPS)
    return jnp.mean(jnp.sqrt(a ** 3 + EPS))


if __name__ == "__main__":
    key = jax.random.PRNGKey(0)
    kp, kt = jax.random.split(key)

    # Small NCHW-like shape consistent with a value-head loss (128-aligned).
    shape = (2, 4, 16, 16)
    predictions = jax.random.normal(kp, shape, dtype=jnp.float32)
    targets = jax.random.normal(kt, shape, dtype=jnp.float32)

    loss = square_root_cube_loss(predictions, targets)
    jax.block_until_ready(loss)
    ref = _reference(predictions, targets)
    assert jnp.allclose(loss, ref, rtol=1e-5, atol=1e-6), (loss, ref)

    # Second check: non-block-aligned size exercising the in-kernel tail mask
    # (no full-array padding pass).
    shape2 = (2, 4, 15, 16)
    p2 = jax.random.normal(kp, shape2, dtype=jnp.float32)
    t2 = jax.random.normal(kt, shape2, dtype=jnp.float32)
    loss2 = square_root_cube_loss(p2, t2)
    jax.block_until_ready(loss2)
    ref2 = _reference(p2, t2)
    assert jnp.allclose(loss2, ref2, rtol=1e-5, atol=1e-6), (loss2, ref2)

    print("KERNEL_OK")
</pallas_src>

<mosaic_0001>
module attributes {stable_mosaic.version = 11 : i64} {
  func.func @_sqrt_cube_loss_kernel(%arg0: i32, %arg1: i32, %arg2: memref<16x128xf32, #tpu.memory_space<vmem>>, %arg3: memref<16x128xf32, #tpu.memory_space<vmem>>, %arg4: memref<1x8x128xf32, #tpu.memory_space<vmem>>) attributes {dimension_semantics = [#tpu.dimension_semantics<parallel>, #tpu.dimension_semantics<arbitrary>], iteration_bounds = array<i64: 1, 1>, scalar_prefetch = 0 : i64, scratch_operands = 0 : i64, tpu.core_type = #tpu.core_type<tc>, window_params = [{transform_indices = @transform_0, window_bounds = array<i64: 16, 128>}, {transform_indices = @transform_1, window_bounds = array<i64: 16, 128>}, {transform_indices = @transform_2, window_bounds = array<i64: 1, 8, 128>}]} {
    %c0_i32 = arith.constant 0 : i32
    %0 = arith.cmpi eq, %arg1, %c0_i32 : i32
    %1 = arith.extui %0 : i1 to i32
    %c0_i32_0 = arith.constant 0 : i32
    %2 = arith.cmpi ne, %1, %c0_i32_0 : i32
    scf.if %2 {
      %cst_13 = arith.constant 0.000000e+00 : f32
      %26 = vector.broadcast %cst_13 : f32 to vector<1x8x128xf32>
      %c0_14 = arith.constant 0 : index
      %c0_15 = arith.constant 0 : index
      %c0_16 = arith.constant 0 : index
      %27 = vector.load %arg4[%c0_14, %c0_15, %c0_16] : memref<1x8x128xf32, #tpu.memory_space<vmem>>, vector<1x8x128xf32>
      tpu.vector_store %arg4[%c0_14, %c0_15, %c0_16], %26 {strides = array<i32>} : memref<1x8x128xf32, #tpu.memory_space<vmem>>, vector<1x8x128xf32>,
    } else {
    }
    %c0_i32_1 = arith.constant 0 : i32
    %c1_i32 = arith.constant 1 : i32
    %3 = arith.muli %c0_i32_1, %c1_i32 : i32
    %c0_i32_2 = arith.constant 0 : i32
    %4 = arith.addi %c0_i32_2, %3 : i32
    %c16_i32 = arith.constant 16 : i32
    %5 = arith.muli %4, %c16_i32 : i32
    %6 = tpu.assume_multiple %5, 16 : i32
    %7 = arith.index_cast %6 : i32 to index
    %c0 = arith.constant 0 : index
    %8 = vector.load %arg2[%7, %c0] : memref<16x128xf32, #tpu.memory_space<vmem>>, vector<16x128xf32>
    %9 = arith.index_cast %6 : i32 to index
    %c0_3 = arith.constant 0 : index
    %10 = vector.load %arg3[%9, %c0_3] : memref<16x128xf32, #tpu.memory_space<vmem>>, vector<16x128xf32>
    %11 = arith.subf %8, %10 : vector<16x128xf32>
    %12 = arith.mulf %11, %11 : vector<16x128xf32>
    %cst = arith.constant 9.99999997E-7 : f32
    %13 = vector.broadcast %cst : f32 to vector<16x128xf32>
    %14 = arith.addf %12, %13 : vector<16x128xf32>
    %15 = math.sqrt %14 : vector<16x128xf32>
    %16 = arith.mulf %15, %14 : vector<16x128xf32>
    %cst_4 = arith.constant 9.99999997E-7 : f32
    %17 = vector.broadcast %cst_4 : f32 to vector<16x128xf32>
    %18 = arith.addf %16, %17 : vector<16x128xf32>
    %19 = math.sqrt %18 : vector<16x128xf32>
    %20 = vector.shape_cast %19 : vector<16x128xf32> to vector<2x8x128xf32>
    %cst_5 = arith.constant dense<0.000000e+00> : vector<8x128xf32>
    %21 = vector.multi_reduction <add>, %20, %cst_5 [0] : vector<2x8x128xf32> to vector<8x128xf32>
    %c0_6 = arith.constant 0 : index
    %c0_7 = arith.constant 0 : index
    %c0_8 = arith.constant 0 : index
    %22 = vector.load %arg4[%c0_6, %c0_7, %c0_8] : memref<1x8x128xf32, #tpu.memory_space<vmem>>, vector<1x8x128xf32>
    %23 = vector.shape_cast %21 : vector<8x128xf32> to vector<1x8x128xf32>
    %24 = arith.addf %22, %23 : vector<1x8x128xf32>
    %c0_9 = arith.constant 0 : index
    %c0_10 = arith.constant 0 : index
    %c0_11 = arith.constant 0 : index
    %25 = vector.load %arg4[%c0_9, %c0_10, %c0_11] : memref<1x8x128xf32, #tpu.memory_space<vmem>>, vector<1x8x128xf32>
    tpu.vector_store %arg4[%c0_9, %c0_10, %c0_11], %24 {strides = array<i32>} : memref<1x8x128xf32, #tpu.memory_space<vmem>>, vector<1x8x128xf32>,
    %c1_i32_12 = arith.constant 1 : i32
    return
  }
  func.func @transform_0(%arg0: i32, %arg1: i32) -> (i32, i32) {
    %c1_i32 = arith.constant 1 : i32
    %0 = arith.muli %arg0, %c1_i32 : i32
    %1 = arith.addi %0, %arg1 : i32
    %c0_i32 = arith.constant 0 : i32
    %c0_i32_0 = arith.constant 0 : i32
    return %1, %c0_i32 : i32, i32
  }
  func.func @transform_1(%arg0: i32, %arg1: i32) -> (i32, i32) {
    %c1_i32 = arith.constant 1 : i32
    %0 = arith.muli %arg0, %c1_i32 : i32
    %1 = arith.addi %0, %arg1 : i32
    %c0_i32 = arith.constant 0 : i32
    %c0_i32_0 = arith.constant 0 : i32
    return %1, %c0_i32 : i32, i32
  }
  func.func @transform_2(%arg0: i32, %arg1: i32) -> (i32, i32, i32) {
    %c0_i32 = arith.constant 0 : i32
    %c0_i32_0 = arith.constant 0 : i32
    %c0_i32_1 = arith.constant 0 : i32
    return %arg0, %c0_i32, %c0_i32_0 : i32, i32, i32
  }
}

</mosaic_0001>

<llo_original>
// kernel: tpu_custom_call.1
$region0: #{tpu_custom_call.1}
  #allocation0 [shape = 'u32[]', space=smem, size = 0x4, offset = 0x4, fixed_abs, tag = 'smem constant byte address 0x4 - core index']
  #allocation1 [shape = 'u32[144,128]{1,0:T(1,128)}', space=vmem, size = 0x12000, scoped, tag = 'internal scratch']
  %s0 = inlined_call_operand.hbm [shape: f32[16,128], index: 0, kind: input, shape index: {}]
  %s1 = inlined_call_operand.hbm [shape: f32[16,128], index: 1, kind: input, shape index: {}]
  %s2 = inlined_call_operand.hbm [shape: f32[1,8,128], index: 2, kind: output, shape index: {}]
  %s3 = sld [smem:[#allocation0]]
  $region30: #{tpu_custom_call.1} parent=0
    _
  %s5 = ssub.s32 1, %s3
  %s6 = scalar_select 0, %s5, %s3
  $region1: #{tpu_custom_call.1} parent=0
    #allocation2 [shape = 'u8[8192]{0}', space=vmem, size = 0x2000, scoped, tag = 'input window, operand 0, single buffered']
    #allocation3 [shape = 's32[1]{0}', space=sflag, size = 0x4, scoped, tag = 'scoped memory for tpu_custom_call.1']
    #allocation4 [shape = 's32[1]{0}', space=sflag, size = 0x4, scoped, tag = 'scoped memory for tpu_custom_call.1']
    #allocation5 [shape = 'u8[8192]{0}', space=vmem, size = 0x2000, scoped, tag = 'input window, operand 1, single buffered']
    #allocation6 [shape = 's32[1]{0}', space=sflag, size = 0x4, scoped, tag = 'scoped memory for tpu_custom_call.1']
    #allocation7 [shape = 'u8[4096]{0}', space=vmem, size = 0x1000, scoped, tag = 'output window, operand 0, single buffered']
    %7 = vsyncpa [#allocation3], 0
    %8 = vsyncpa [#allocation6], 0
    %9 = vsyncpa [#allocation4], 0
    // Predicated region
    $region2: #{tpu_custom_call.1} parent=1 // pred_check
      _
    $region3: #{tpu_custom_call.1} parent=1 // pred_check_branch
      %11 = sbr.rel (0) target = $region5
    $region4: #{tpu_custom_call.1} parent=1 // pred_region
      %s12 = sadd.s32 0, 0
      %s13 = smul.u32 2, %s12
      %s15 = ssub.s32 256, 256
      %16 = vsyncadd [#allocation3], %s15
      %s17 = smul.addr %s13, 128
      %s18 = scalar_lea.hbm %s0, %s17
      %s19 = sshll.u32 [#allocation2], 4
      %s20 = int_to_ptr.vmem [resolvable:$true] %s19
      %25 = dma.hbm_to_vmem [thread:$0]  %s18, 256, %s20, [#allocation3], 128, 128, 8
    $region5: #{tpu_custom_call.1} parent=1 // pred_fallthru
      _
    // Predicated region
    $region6: #{tpu_custom_call.1} parent=1 // pred_check
      _
    $region7: #{tpu_custom_call.1} parent=1 // pred_check_branch
      %27 = sbr.rel (0) target = $region9
    $region8: #{tpu_custom_call.1} parent=1 // pred_region
      %s28 = sadd.s32 0, 0
      %s29 = smul.u32 2, %s28
      %s31 = ssub.s32 256, 256
      %32 = vsyncadd [#allocation6], %s31
      %s33 = smul.addr %s29, 128
      %s34 = scalar_lea.hbm %s1, %s33
      %s35 = sshll.u32 [#allocation5], 4
      %s36 = int_to_ptr.vmem [resolvable:$true] %s35
      %41 = dma.hbm_to_vmem [thread:$0]  %s34, 256, %s36, [#allocation6], 128, 128, 8
    $region9: #{tpu_custom_call.1} parent=1 // pred_fallthru
      _
    // Predicated region
    $region10: #{tpu_custom_call.1} parent=1 // pred_check
      _
    $region11: #{tpu_custom_call.1} parent=1 // pred_check_branch
      %43 = sbr.rel (0) target = $region13
    $region12: #{tpu_custom_call.1} parent=1 // pred_region
      %44 = dma.done [#allocation3], 256
    $region13: #{tpu_custom_call.1} parent=1 // pred_fallthru
      _
    // Predicated region
    $region14: #{tpu_custom_call.1} parent=1 // pred_check
      _
    $region15: #{tpu_custom_call.1} parent=1 // pred_check_branch
      %46 = sbr.rel (0) target = $region17
    $region16: #{tpu_custom_call.1} parent=1 // pred_region
      %47 = dma.done [#allocation6], 256
    $region17: #{tpu_custom_call.1} parent=1 // pred_fallthru
      _
    %s48 = sadd.s32 0, 0
    %s49 = smul.u32 2, %s48
    %s50 = sadd.s32 0, 0
    %s51 = smul.u32 2, %s50
    %p52 = scmp.eq.s32.totalorder 0, 0
    // Predicated region
    $region18: #{tpu_custom_call.1} parent=1 // pred_check
      %p53 = pneg %p52
    $region19: #{tpu_custom_call.1} parent=1 // pred_check_branch
      %55 = sbr.rel (%p53) target = $region21
    $region20: #{tpu_custom_call.1} parent=1 // pred_region
      %56 = vst [vmem:[#allocation7] sm:$0xff] 0.0
    $region21: #{tpu_custom_call.1} parent=1 // pred_fallthru
      _
    %v57 = vld [vmem:[#allocation2] sm:$0xff]
    %v58 = vld [vmem:[#allocation2 + $0x8] sm:$0xff]
    %v59 = vld [vmem:[#allocation5] sm:$0xff]
    %v60 = vld [vmem:[#allocation5 + $0x8] sm:$0xff]
    %v61 = vsub.f32 %v57, %v59
    %v62 = vsub.f32 %v58, %v60
    %v63 = vmul.f32 %v61, %v61
    %v64 = vmul.f32 %v62, %v62
    %v65 = vadd.f32 %v63, 1e-06
    %v66 = vadd.f32 %v64, 1e-06
    %v67 = vrsqrt.pop %v65
    %v68 = vmul.f32 %v65, %v67
    %vm69 = vcmp.eq.f32.partialorder %v65, inf
    %v70 = vsel %vm69, %v65, %v68
    %vm71 = vcmp.eq.f32.partialorder %v65, 0.0
    %v72 = vand.u32 %v65, 2147483648
    %v73 = vsel %vm71, %v72, %v70
    %v74 = vrsqrt.pop %v66
    %v75 = vmul.f32 %v66, %v74
    %vm76 = vcmp.eq.f32.partialorder %v66, inf
    %v77 = vsel %vm76, %v66, %v75
    %vm78 = vcmp.eq.f32.partialorder %v66, 0.0
    %v79 = vand.u32 %v66, 2147483648
    %v80 = vsel %vm78, %v79, %v77
    %v81 = vmul.f32 %v73, %v65
    %v82 = vmul.f32 %v80, %v66
    %v83 = vadd.f32 %v81, 1e-06
    %v84 = vadd.f32 %v82, 1e-06
    %v85 = vrsqrt.pop %v83
    %v86 = vmul.f32 %v83, %v85
    %vm87 = vcmp.eq.f32.partialorder %v83, inf
    %v88 = vsel %vm87, %v83, %v86
    %vm89 = vcmp.eq.f32.partialorder %v83, 0.0
    %v90 = vand.u32 %v83, 2147483648
    %v91 = vsel %vm89, %v90, %v88
    %v92 = vrsqrt.pop %v84
    %v93 = vmul.f32 %v84, %v92
    %vm94 = vcmp.eq.f32.partialorder %v84, inf
    %v95 = vsel %vm94, %v84, %v93
    %vm96 = vcmp.eq.f32.partialorder %v84, 0.0
    %v97 = vand.u32 %v84, 2147483648
    %v98 = vsel %vm96, %v97, %v95
    %v99 = vadd.f32 %v91, %v98
    %v100 = vld [vmem:[#allocation7] sm:$0xff]
    %v101 = vadd.f32 %v100, %v99
    %102 = vst [vmem:[#allocation7] sm:$0xff] %v101
    // Predicated region
    $region22: #{tpu_custom_call.1} parent=1 // pred_check
      _
    $region23: #{tpu_custom_call.1} parent=1 // pred_check_branch
      %104 = sbr.rel (0) target = $region25
    $region24: #{tpu_custom_call.1} parent=1 // pred_region
      %s106 = ssub.s32 128, 128
      %107 = vsyncadd [#allocation4], %s106
      %s109 = sshll.u32 [#allocation7], 4
      %s110 = int_to_ptr.vmem [resolvable:$true] %s109
      %112 = dma.vmem_to_hbm [thread:$0]  %s110, 128, %s2, [#allocation4]
    $region25: #{tpu_custom_call.1} parent=1 // pred_fallthru
      _
    // Predicated region
    $region26: #{tpu_custom_call.1} parent=1 // pred_check
      _
    $region27: #{tpu_custom_call.1} parent=1 // pred_check_branch
      %114 = sbr.rel (0) target = $region29
    $region28: #{tpu_custom_call.1} parent=1 // pred_region
      %115 = dma.done [#allocation4], 128
    $region29: #{tpu_custom_call.1} parent=1 // pred_fallthru
      _
    %116 = vsyncpa [#allocation3], 1
    %117 = vsyncpa [#allocation6], 1
    %118 = vsyncpa [#allocation4], 1

</llo_original>
